<compile_context>
chip_gen: v5e
topology: v5e:2x2
jax: 0.10.0
libtpu: 0.0.40
codegen_flags: <defaults>
</compile_context>

<pallas_src>
import jax
import jax.numpy as jnp
from jax import lax
from jax.experimental import pallas as pl
from jax.experimental.pallas import tpu as pltpu

LANE = 128
SUBLANE = 8
MAX_TILE_R = 256            # rows of 128 lanes per grid step (<= 640 KiB / output block)
_MIN_PALLAS_SPATIAL = 4096  # below this many pixels per image use the XLA path.
                            # Set low so the 64x64 demo exercises the kernel; raise
                            # in production (the kernel pays off once HBM BW, not
                            # launch latency, is the limiter).


def _round_up(x, m):
    return ((x + m - 1) // m) * m


def _conv1x1_kernel(x_ref, w_ref, b_ref, o_ref):
    # x_ref: (Cin, TR, 128)  VMEM  -- full dense (8,128) tiles
    # w_ref: (Cout*Cin,)     SMEM scalars (flat -> no 2-D SMEM padding)
    # b_ref: (Cout,)         SMEM scalars
    # o_ref: (Cout, TR, 128) VMEM
    cin = x_ref.shape[0]
    cout = o_ref.shape[0]
    xs = [x_ref[k] for k in range(cin)]            # cin dense tile loads, reused cout times
    for c in range(cout):                          # fully unrolled VPU FMAs
        acc = xs[0] * w_ref[c * cin + 0]
        for k in range(1, cin):
            acc = acc + xs[k] * w_ref[c * cin + k]
        o_ref[c] = acc + b_ref[c]                  # dense, unmasked vector stores


@jax.jit
def _conv1x1_interior_pallas(x_nchw, w_flat, bias):
    """Interior (no border) of the 1x1 conv via a gridded Pallas kernel."""
    n, cin, h, w = x_nchw.shape
    cout = bias.shape[0]
    hw = h * w

    r = -(-hw // LANE)                             # rows of 128 lanes per image
    tile_r = min(MAX_TILE_R, _round_up(r, SUBLANE))
    r_pad = _round_up(r, tile_r)
    s_pad = r_pad * LANE

    x_slab = x_nchw.reshape(n, cin, hw)            # free reshape, no NCHW transpose
    if s_pad != hw:
        x_slab = jnp.pad(x_slab, ((0, 0), (0, 0), (0, s_pad - hw)))
    x_slab = x_slab.reshape(n, cin, r_pad, LANE)

    grid = (n, r_pad // tile_r)
    out = pl.pallas_call(
        _conv1x1_kernel,
        out_shape=jax.ShapeDtypeStruct((n, cout, r_pad, LANE), jnp.float32),
        grid_spec=pltpu.PrefetchScalarGridSpec(
            num_scalar_prefetch=0,
            grid=grid,
            in_specs=[
                pl.BlockSpec((None, cin, tile_r, LANE), lambda b, t: (b, 0, t, 0)),
                pl.BlockSpec(memory_space=pltpu.MemorySpace.SMEM),   # flat weights
                pl.BlockSpec(memory_space=pltpu.MemorySpace.SMEM),   # bias
            ],
            out_specs=pl.BlockSpec((None, cout, tile_r, LANE),
                                   lambda b, t: (b, 0, t, 0)),
        ),
        compiler_params=pltpu.CompilerParams(
            dimension_semantics=("parallel", "parallel")),
    )(x_slab, w_flat, bias)

    # (N, Cout, R, 128) -> (N, Cout, H, W); slice drops padded-tail garbage only.
    interior = out.reshape(n, cout, s_pad)[:, :, :hw].reshape(n, cout, h, w)
    return interior


@jax.jit
def _conv1x1_interior_xla(x_nchw, w2, bias):
    """Interior of the 1x1 conv for tiny problems: a single fused XLA einsum."""
    return jnp.einsum("oc,nchw->nohw", w2, x_nchw) + bias[None, :, None, None]


def conv2d_1x1_pad1(x_nchw, weight_oihw, bias):
    """Conv2d(Cin->Cout, kernel_size=1, stride=1, padding=1) + bias, NCHW in/out."""
    n, cin, h, w = x_nchw.shape
    cout = weight_oihw.shape[0]
    x_nchw = x_nchw.astype(jnp.float32)
    bias = bias.astype(jnp.float32)

    if h * w >= _MIN_PALLAS_SPATIAL:
        w_flat = weight_oihw.reshape(cout * cin).astype(jnp.float32)
        interior = _conv1x1_interior_pallas(x_nchw, w_flat, bias)
    else:
        w2 = weight_oihw.reshape(cout, cin).astype(jnp.float32)
        interior = _conv1x1_interior_xla(x_nchw, w2, bias)

    # padding=1 with a 1x1 kernel: the border rows/cols are exactly the bias.
    # (Only valid for kernel_size=1, stride=1, zero padding.)
    canvas = jnp.broadcast_to(bias[None, :, None, None], (n, cout, h + 2, w + 2))
    return lax.dynamic_update_slice(canvas, interior, (0, 0, 1, 1))


def init_conv_params(key, cout, cin):
    """Deterministic PyTorch-style Conv2d default init (kaiming uniform, fan_in=cin)."""
    kw, kb = jax.random.split(key)
    bound = 1.0 / jnp.sqrt(cin)
    weight = jax.random.uniform(kw, (cout, cin, 1, 1), jnp.float32, -bound, bound)
    bias = jax.random.uniform(kb, (cout,), jnp.float32, -bound, bound)
    return weight, bias


def model_forward(x, params):
    (w1, b1), (w2, b2) = params
    # v1 = self.conv(x)
    v1 = conv2d_1x1_pad1(x, w1, b1)

    # v2 = self.conv1(torch.tensor([[0.1,0.1,0.1],[-0.1,-0.1,-0.1],[-0.1,-0.1,-0.1]]))
    const = jnp.array(
        [[0.1, 0.1, 0.1], [-0.1, -0.1, -0.1], [-0.1, -0.1, -0.1]], dtype=jnp.float32
    )
    # TODO(synk): the reference passes a 2-D tensor to Conv2d (PyTorch raises) and
    # `v1 + v2` is not broadcastable under any valid reading; we compute v2 with the
    # constant viewed as a (1, 3, 1, 3) NCHW image and return (v1, v2) instead of the
    # undefined sum.  The tiny v2 conv (3 pixels) stays on the fused XLA path.
    const_nchw = const.reshape(1, 3, 1, 3)
    v2 = conv2d_1x1_pad1(const_nchw, w2, b2)
    return v1, v2


if __name__ == "__main__":
    key = jax.random.PRNGKey(0)
    kx, k1, k2 = jax.random.split(key, 3)

    # input consistent with the module spec: x = torch.randn(1, 3, 64, 64)
    x = jax.random.normal(kx, (1, 3, 64, 64), jnp.float32)
    params = (init_conv_params(k1, 5, 3), init_conv_params(k2, 5, 3))

    v1, v2 = model_forward(x, params)
    v1, v2 = jax.block_until_ready(v1), jax.block_until_ready(v2)

    # correctness check of both conv paths against the lax reference
    (w1, b1), (w2, b2) = params
    ref1 = lax.conv_general_dilated(
        x, w1, window_strides=(1, 1), padding=((1, 1), (1, 1)),
        dimension_numbers=("NCHW", "OIHW", "NCHW"),
    ) + b1[None, :, None, None]
    const_nchw = jnp.array(
        [[0.1, 0.1, 0.1], [-0.1, -0.1, -0.1], [-0.1, -0.1, -0.1]], dtype=jnp.float32
    ).reshape(1, 3, 1, 3)
    ref2 = lax.conv_general_dilated(
        const_nchw, w2, window_strides=(1, 1), padding=((1, 1), (1, 1)),
        dimension_numbers=("NCHW", "OIHW", "NCHW"),
    ) + b2[None, :, None, None]

    assert v1.shape == (1, 5, 66, 66), v1.shape
    assert v2.shape == (1, 5, 3, 5), v2.shape
    assert jnp.allclose(v1, ref1, atol=1e-5, rtol=1e-5)
    assert jnp.allclose(v2, ref2, atol=1e-5, rtol=1e-5)

    print("KERNEL_OK")
</pallas_src>

<mosaic_0001>
module attributes {stable_mosaic.version = 11 : i64} {
  func.func @_conv1x1_kernel(%arg0: i32, %arg1: i32, %arg2: memref<1x3x32x128xf32, #tpu.memory_space<vmem>>, %arg3: memref<15xf32, #tpu.memory_space<smem>>, %arg4: memref<5xf32, #tpu.memory_space<smem>>, %arg5: memref<1x5x32x128xf32, #tpu.memory_space<vmem>>) attributes {dimension_semantics = [#tpu.dimension_semantics<parallel>, #tpu.dimension_semantics<parallel>], iteration_bounds = array<i64: 1, 1>, scalar_prefetch = 0 : i64, scratch_operands = 0 : i64, tpu.core_type = #tpu.core_type<tc>, window_params = [{transform_indices = @transform_0, window_bounds = array<i64: 1, 3, 32, 128>}, {transform_indices = @transform_1, window_bounds = array<i64: 15>}, {transform_indices = @transform_2, window_bounds = array<i64: 5>}, {transform_indices = @transform_3, window_bounds = array<i64: 1, 5, 32, 128>}]} {
    %c0 = arith.constant 0 : index
    %c0_0 = arith.constant 0 : index
    %c0_1 = arith.constant 0 : index
    %c0_2 = arith.constant 0 : index
    %0 = vector.load %arg2[%c0, %c0_0, %c0_1, %c0_2] : memref<1x3x32x128xf32, #tpu.memory_space<vmem>>, vector<1x1x32x128xf32>
    %1 = vector.shape_cast %0 : vector<1x1x32x128xf32> to vector<32x128xf32>
    %c0_3 = arith.constant 0 : index
    %c1 = arith.constant 1 : index
    %c0_4 = arith.constant 0 : index
    %c0_5 = arith.constant 0 : index
    %2 = vector.load %arg2[%c0_3, %c1, %c0_4, %c0_5] : memref<1x3x32x128xf32, #tpu.memory_space<vmem>>, vector<1x1x32x128xf32>
    %3 = vector.shape_cast %2 : vector<1x1x32x128xf32> to vector<32x128xf32>
    %c0_6 = arith.constant 0 : index
    %c2 = arith.constant 2 : index
    %c0_7 = arith.constant 0 : index
    %c0_8 = arith.constant 0 : index
    %4 = vector.load %arg2[%c0_6, %c2, %c0_7, %c0_8] : memref<1x3x32x128xf32, #tpu.memory_space<vmem>>, vector<1x1x32x128xf32>
    %5 = vector.shape_cast %4 : vector<1x1x32x128xf32> to vector<32x128xf32>
    %c0_9 = arith.constant 0 : index
    %6 = memref.load %arg3[%c0_9] : memref<15xf32, #tpu.memory_space<smem>>
    %7 = vector.broadcast %6 : f32 to vector<32x128xf32>
    %8 = arith.mulf %1, %7 : vector<32x128xf32>
    %c1_10 = arith.constant 1 : index
    %9 = memref.load %arg3[%c1_10] : memref<15xf32, #tpu.memory_space<smem>>
    %10 = vector.broadcast %9 : f32 to vector<32x128xf32>
    %11 = arith.mulf %3, %10 : vector<32x128xf32>
    %12 = arith.addf %8, %11 : vector<32x128xf32>
    %c2_11 = arith.constant 2 : index
    %13 = memref.load %arg3[%c2_11] : memref<15xf32, #tpu.memory_space<smem>>
    %14 = vector.broadcast %13 : f32 to vector<32x128xf32>
    %15 = arith.mulf %5, %14 : vector<32x128xf32>
    %16 = arith.addf %12, %15 : vector<32x128xf32>
    %c0_12 = arith.constant 0 : index
    %17 = memref.load %arg4[%c0_12] : memref<5xf32, #tpu.memory_space<smem>>
    %18 = vector.broadcast %17 : f32 to vector<32x128xf32>
    %19 = arith.addf %16, %18 : vector<32x128xf32>
    %c0_13 = arith.constant 0 : index
    %c0_14 = arith.constant 0 : index
    %c0_15 = arith.constant 0 : index
    %c0_16 = arith.constant 0 : index
    %20 = vector.load %arg5[%c0_13, %c0_14, %c0_15, %c0_16] : memref<1x5x32x128xf32, #tpu.memory_space<vmem>>, vector<1x1x32x128xf32>
    %21 = vector.shape_cast %20 : vector<1x1x32x128xf32> to vector<32x128xf32>
    %22 = vector.shape_cast %19 : vector<32x128xf32> to vector<1x1x32x128xf32>
    tpu.vector_store %arg5[%c0_13, %c0_14, %c0_15, %c0_16], %22 {strides = array<i32>} : memref<1x5x32x128xf32, #tpu.memory_space<vmem>>, vector<1x1x32x128xf32>,
    %c3 = arith.constant 3 : index
    %23 = memref.load %arg3[%c3] : memref<15xf32, #tpu.memory_space<smem>>
    %24 = vector.broadcast %23 : f32 to vector<32x128xf32>
    %25 = arith.mulf %1, %24 : vector<32x128xf32>
    %c4 = arith.constant 4 : index
    %26 = memref.load %arg3[%c4] : memref<15xf32, #tpu.memory_space<smem>>
    %27 = vector.broadcast %26 : f32 to vector<32x128xf32>
    %28 = arith.mulf %3, %27 : vector<32x128xf32>
    %29 = arith.addf %25, %28 : vector<32x128xf32>
    %c5 = arith.constant 5 : index
    %30 = memref.load %arg3[%c5] : memref<15xf32, #tpu.memory_space<smem>>
    %31 = vector.broadcast %30 : f32 to vector<32x128xf32>
    %32 = arith.mulf %5, %31 : vector<32x128xf32>
    %33 = arith.addf %29, %32 : vector<32x128xf32>
    %c1_17 = arith.constant 1 : index
    %34 = memref.load %arg4[%c1_17] : memref<5xf32, #tpu.memory_space<smem>>
    %35 = vector.broadcast %34 : f32 to vector<32x128xf32>
    %36 = arith.addf %33, %35 : vector<32x128xf32>
    %c0_18 = arith.constant 0 : index
    %c1_19 = arith.constant 1 : index
    %c0_20 = arith.constant 0 : index
    %c0_21 = arith.constant 0 : index
    %37 = vector.load %arg5[%c0_18, %c1_19, %c0_20, %c0_21] : memref<1x5x32x128xf32, #tpu.memory_space<vmem>>, vector<1x1x32x128xf32>
    %38 = vector.shape_cast %37 : vector<1x1x32x128xf32> to vector<32x128xf32>
    %39 = vector.shape_cast %36 : vector<32x128xf32> to vector<1x1x32x128xf32>
    tpu.vector_store %arg5[%c0_18, %c1_19, %c0_20, %c0_21], %39 {strides = array<i32>} : memref<1x5x32x128xf32, #tpu.memory_space<vmem>>, vector<1x1x32x128xf32>,
    %c6 = arith.constant 6 : index
    %40 = memref.load %arg3[%c6] : memref<15xf32, #tpu.memory_space<smem>>
    %41 = vector.broadcast %40 : f32 to vector<32x128xf32>
    %42 = arith.mulf %1, %41 : vector<32x128xf32>
    %c7 = arith.constant 7 : index
    %43 = memref.load %arg3[%c7] : memref<15xf32, #tpu.memory_space<smem>>
    %44 = vector.broadcast %43 : f32 to vector<32x128xf32>
    %45 = arith.mulf %3, %44 : vector<32x128xf32>
    %46 = arith.addf %42, %45 : vector<32x128xf32>
    %c8 = arith.constant 8 : index
    %47 = memref.load %arg3[%c8] : memref<15xf32, #tpu.memory_space<smem>>
    %48 = vector.broadcast %47 : f32 to vector<32x128xf32>
    %49 = arith.mulf %5, %48 : vector<32x128xf32>
    %50 = arith.addf %46, %49 : vector<32x128xf32>
    %c2_22 = arith.constant 2 : index
    %51 = memref.load %arg4[%c2_22] : memref<5xf32, #tpu.memory_space<smem>>
    %52 = vector.broadcast %51 : f32 to vector<32x128xf32>
    %53 = arith.addf %50, %52 : vector<32x128xf32>
    %c0_23 = arith.constant 0 : index
    %c2_24 = arith.constant 2 : index
    %c0_25 = arith.constant 0 : index
    %c0_26 = arith.constant 0 : index
    %54 = vector.load %arg5[%c0_23, %c2_24, %c0_25, %c0_26] : memref<1x5x32x128xf32, #tpu.memory_space<vmem>>, vector<1x1x32x128xf32>
    %55 = vector.shape_cast %54 : vector<1x1x32x128xf32> to vector<32x128xf32>
    %56 = vector.shape_cast %53 : vector<32x128xf32> to vector<1x1x32x128xf32>
    tpu.vector_store %arg5[%c0_23, %c2_24, %c0_25, %c0_26], %56 {strides = array<i32>} : memref<1x5x32x128xf32, #tpu.memory_space<vmem>>, vector<1x1x32x128xf32>,
    %c9 = arith.constant 9 : index
    %57 = memref.load %arg3[%c9] : memref<15xf32, #tpu.memory_space<smem>>
    %58 = vector.broadcast %57 : f32 to vector<32x128xf32>
    %59 = arith.mulf %1, %58 : vector<32x128xf32>
    %c10 = arith.constant 10 : index
    %60 = memref.load %arg3[%c10] : memref<15xf32, #tpu.memory_space<smem>>
    %61 = vector.broadcast %60 : f32 to vector<32x128xf32>
    %62 = arith.mulf %3, %61 : vector<32x128xf32>
    %63 = arith.addf %59, %62 : vector<32x128xf32>
    %c11 = arith.constant 11 : index
    %64 = memref.load %arg3[%c11] : memref<15xf32, #tpu.memory_space<smem>>
    %65 = vector.broadcast %64 : f32 to vector<32x128xf32>
    %66 = arith.mulf %5, %65 : vector<32x128xf32>
    %67 = arith.addf %63, %66 : vector<32x128xf32>
    %c3_27 = arith.constant 3 : index
    %68 = memref.load %arg4[%c3_27] : memref<5xf32, #tpu.memory_space<smem>>
    %69 = vector.broadcast %68 : f32 to vector<32x128xf32>
    %70 = arith.addf %67, %69 : vector<32x128xf32>
    %c0_28 = arith.constant 0 : index
    %c3_29 = arith.constant 3 : index
    %c0_30 = arith.constant 0 : index
    %c0_31 = arith.constant 0 : index
    %71 = vector.load %arg5[%c0_28, %c3_29, %c0_30, %c0_31] : memref<1x5x32x128xf32, #tpu.memory_space<vmem>>, vector<1x1x32x128xf32>
    %72 = vector.shape_cast %71 : vector<1x1x32x128xf32> to vector<32x128xf32>
    %73 = vector.shape_cast %70 : vector<32x128xf32> to vector<1x1x32x128xf32>
    tpu.vector_store %arg5[%c0_28, %c3_29, %c0_30, %c0_31], %73 {strides = array<i32>} : memref<1x5x32x128xf32, #tpu.memory_space<vmem>>, vector<1x1x32x128xf32>,
    %c12 = arith.constant 12 : index
    %74 = memref.load %arg3[%c12] : memref<15xf32, #tpu.memory_space<smem>>
    %75 = vector.broadcast %74 : f32 to vector<32x128xf32>
    %76 = arith.mulf %1, %75 : vector<32x128xf32>
    %c13 = arith.constant 13 : index
    %77 = memref.load %arg3[%c13] : memref<15xf32, #tpu.memory_space<smem>>
    %78 = vector.broadcast %77 : f32 to vector<32x128xf32>
    %79 = arith.mulf %3, %78 : vector<32x128xf32>
    %80 = arith.addf %76, %79 : vector<32x128xf32>
    %c14 = arith.constant 14 : index
    %81 = memref.load %arg3[%c14] : memref<15xf32, #tpu.memory_space<smem>>
    %82 = vector.broadcast %81 : f32 to vector<32x128xf32>
    %83 = arith.mulf %5, %82 : vector<32x128xf32>
    %84 = arith.addf %80, %83 : vector<32x128xf32>
    %c4_32 = arith.constant 4 : index
    %85 = memref.load %arg4[%c4_32] : memref<5xf32, #tpu.memory_space<smem>>
    %86 = vector.broadcast %85 : f32 to vector<32x128xf32>
    %87 = arith.addf %84, %86 : vector<32x128xf32>
    %c0_33 = arith.constant 0 : index
    %c4_34 = arith.constant 4 : index
    %c0_35 = arith.constant 0 : index
    %c0_36 = arith.constant 0 : index
    %88 = vector.load %arg5[%c0_33, %c4_34, %c0_35, %c0_36] : memref<1x5x32x128xf32, #tpu.memory_space<vmem>>, vector<1x1x32x128xf32>
    %89 = vector.shape_cast %88 : vector<1x1x32x128xf32> to vector<32x128xf32>
    %90 = vector.shape_cast %87 : vector<32x128xf32> to vector<1x1x32x128xf32>
    tpu.vector_store %arg5[%c0_33, %c4_34, %c0_35, %c0_36], %90 {strides = array<i32>} : memref<1x5x32x128xf32, #tpu.memory_space<vmem>>, vector<1x1x32x128xf32>,
    return
  }
  func.func @transform_0(%arg0: i32, %arg1: i32) -> (i32, i32, i32, i32) {
    %c0_i32 = arith.constant 0 : i32
    %c0_i32_0 = arith.constant 0 : i32
    %c0_i32_1 = arith.constant 0 : i32
    return %arg0, %c0_i32, %arg1, %c0_i32_0 : i32, i32, i32, i32
  }
  func.func @transform_1(%arg0: i32, %arg1: i32) -> i32 {
    %c0_i32 = arith.constant 0 : i32
    %c0_i32_0 = arith.constant 0 : i32
    return %c0_i32 : i32
  }
  func.func @transform_2(%arg0: i32, %arg1: i32) -> i32 {
    %c0_i32 = arith.constant 0 : i32
    %c0_i32_0 = arith.constant 0 : i32
    return %c0_i32 : i32
  }
  func.func @transform_3(%arg0: i32, %arg1: i32) -> (i32, i32, i32, i32) {
    %c0_i32 = arith.constant 0 : i32
    %c0_i32_0 = arith.constant 0 : i32
    %c0_i32_1 = arith.constant 0 : i32
    return %arg0, %c0_i32, %arg1, %c0_i32_0 : i32, i32, i32, i32
  }
}

</mosaic_0001>

<llo_original>
// kernel: _conv1x1_interior_pallas.1
$region0: #{_conv1x1_interior_pallas.1}
  #allocation0 [shape = 'u32[]', space=smem, size = 0x4, offset = 0x4, fixed_abs, tag = 'smem constant byte address 0x4 - core index']
  #allocation1 [shape = 'u32[72,128]{1,0:T(1,128)}', space=vmem, size = 0x9000, scoped, tag = 'internal scratch']
  %s0 = inlined_call_operand.vmem [shape: f32[1,3,32,128], index: 0, kind: input, shape index: {}]
  %s1 = inlined_call_operand.vmem [shape: f32[15], index: 1, kind: input, shape index: {}]
  %s2 = inlined_call_operand.vmem [shape: f32[5], index: 2, kind: input, shape index: {}]
  %s3 = inlined_call_operand.vmem [shape: f32[1,5,32,128], index: 3, kind: output, shape index: {}]
  %s4 = sld [smem:[#allocation0]]
  $region30: #{_conv1x1_interior_pallas.1} parent=0
    _
  %s6 = ssub.s32 1, %s4
  %s7 = scalar_select 0, %s6, %s4
  $region1: #{_conv1x1_interior_pallas.1} parent=0
    #allocation2 [shape = 'u8[512]{0}', space=smem, size = 0x200, scoped, tag = 'input window, operand 1, single buffered']
    #allocation3 [shape = 's32[1]{0}', space=sflag, size = 0x4, scoped, tag = 'scoped memory for _conv1x1_interior_pallas.1']
    #allocation4 [shape = 'u8[512]{0}', space=smem, size = 0x200, scoped, tag = 'input window, operand 2, single buffered']
    #allocation5 [shape = 's32[1]{0}', space=sflag, size = 0x4, scoped, tag = 'scoped memory for _conv1x1_interior_pallas.1']
    %8 = vsyncpa [#allocation3], 0
    %9 = vsyncpa [#allocation5], 0
    // Predicated region
    $region2: #{_conv1x1_interior_pallas.1} parent=1 // pred_check
      _
    $region3: #{_conv1x1_interior_pallas.1} parent=1 // pred_check_branch
      %11 = sbr.rel (0) target = $region5
    $region4: #{_conv1x1_interior_pallas.1} parent=1 // pred_region
      _
    $region5: #{_conv1x1_interior_pallas.1} parent=1 // pred_fallthru
      _
    // Predicated region
    $region6: #{_conv1x1_interior_pallas.1} parent=1 // pred_check
      _
    $region7: #{_conv1x1_interior_pallas.1} parent=1 // pred_check_branch
      %13 = sbr.rel (0) target = $region9
    $region8: #{_conv1x1_interior_pallas.1} parent=1 // pred_region
      %15 = vsyncadd [#allocation3], 0
      %s17 = sshll.u32 %s1, 4
      %s18 = int_to_ptr.vmem [resolvable:$true] %s17
      %20 = dma.vmem_to_smem %s18, 16, [#allocation2], [#allocation3]
    $region9: #{_conv1x1_interior_pallas.1} parent=1 // pred_fallthru
      _
    // Predicated region
    $region10: #{_conv1x1_interior_pallas.1} parent=1 // pred_check
      _
    $region11: #{_conv1x1_interior_pallas.1} parent=1 // pred_check_branch
      %22 = sbr.rel (0) target = $region13
    $region12: #{_conv1x1_interior_pallas.1} parent=1 // pred_region
      %24 = vsyncadd [#allocation5], 0
      %s26 = sshll.u32 %s2, 4
      %s27 = int_to_ptr.vmem [resolvable:$true] %s26
      %29 = dma.vmem_to_smem %s27, 16, [#allocation4], [#allocation5]
    $region13: #{_conv1x1_interior_pallas.1} parent=1 // pred_fallthru
      _
    // Predicated region
    $region14: #{_conv1x1_interior_pallas.1} parent=1 // pred_check
      _
    $region15: #{_conv1x1_interior_pallas.1} parent=1 // pred_check_branch
      %31 = sbr.rel (0) target = $region17
    $region16: #{_conv1x1_interior_pallas.1} parent=1 // pred_region
      %33 = dma.done [#allocation3], 16
    $region17: #{_conv1x1_interior_pallas.1} parent=1 // pred_fallthru
      _
    // Predicated region
    $region18: #{_conv1x1_interior_pallas.1} parent=1 // pred_check
      _
    $region19: #{_conv1x1_interior_pallas.1} parent=1 // pred_check_branch
      %35 = sbr.rel (0) target = $region21
    $region20: #{_conv1x1_interior_pallas.1} parent=1 // pred_region
      %37 = dma.done [#allocation5], 16
    $region21: #{_conv1x1_interior_pallas.1} parent=1 // pred_fallthru
      _
    %38 = sfence
    %v39 = vld [vmem:[%s0] sm:$0xff]
    %v40 = vld [vmem:[%s0 + $0x8] sm:$0xff]
    %v41 = vld [vmem:[%s0 + $0x10] sm:$0xff]
    %v42 = vld [vmem:[%s0 + $0x18] sm:$0xff]
    %s43 = scalar_lea.vmem %s0, 32
    %v44 = vld [vmem:[%s43] sm:$0xff]
    %v45 = vld [vmem:[%s43 + $0x8] sm:$0xff]
    %v46 = vld [vmem:[%s43 + $0x10] sm:$0xff]
    %v47 = vld [vmem:[%s43 + $0x18] sm:$0xff]
    %s48 = scalar_lea.vmem %s0, 64
    %v49 = vld [vmem:[%s48] sm:$0xff]
    %v50 = vld [vmem:[%s48 + $0x8] sm:$0xff]
    %v51 = vld [vmem:[%s48 + $0x10] sm:$0xff]
    %v52 = vld [vmem:[%s48 + $0x18] sm:$0xff]
    %s53 = sld [smem:[#allocation2]]
    %v54 = vstv %s53
    %v55 = vmul.f32 %v39, %v54
    %v56 = vmul.f32 %v40, %v54
    %v57 = vmul.f32 %v41, %v54
    %v58 = vmul.f32 %v42, %v54
    %s59 = sld [smem:[#allocation2 + $0x1]]
    %v60 = vstv %s59
    %v61 = vmul.f32 %v44, %v60
    %v62 = vmul.f32 %v45, %v60
    %v63 = vmul.f32 %v46, %v60
    %v64 = vmul.f32 %v47, %v60
    %v65 = vadd.f32 %v55, %v61
    %v66 = vadd.f32 %v56, %v62
    %v67 = vadd.f32 %v57, %v63
    %v68 = vadd.f32 %v58, %v64
    %s69 = sld [smem:[#allocation2 + $0x2]]
    %v70 = vstv %s69
    %v71 = vmul.f32 %v49, %v70
    %v72 = vmul.f32 %v50, %v70
    %v73 = vmul.f32 %v51, %v70
    %v74 = vmul.f32 %v52, %v70
    %v75 = vadd.f32 %v65, %v71
    %v76 = vadd.f32 %v66, %v72
    %v77 = vadd.f32 %v67, %v73
    %v78 = vadd.f32 %v68, %v74
    %s79 = sld [smem:[#allocation4]]
    %v80 = vstv %s79
    %v81 = vadd.f32 %v75, %v80
    %v82 = vadd.f32 %v76, %v80
    %v83 = vadd.f32 %v77, %v80
    %v84 = vadd.f32 %v78, %v80
    %85 = vst [vmem:[%s3] sm:$0xff] %v81
    %86 = vst [vmem:[%s3 + $0x8] sm:$0xff] %v82
    %87 = vst [vmem:[%s3 + $0x10] sm:$0xff] %v83
    %88 = vst [vmem:[%s3 + $0x18] sm:$0xff] %v84
    %s89 = sld [smem:[#allocation2 + $0x3]]
    %v90 = vstv %s89
    %v91 = vmul.f32 %v39, %v90
    %v92 = vmul.f32 %v40, %v90
    %v93 = vmul.f32 %v41, %v90
    %v94 = vmul.f32 %v42, %v90
    %s95 = sld [smem:[#allocation2 + $0x4]]
    %v96 = vstv %s95
    %v97 = vmul.f32 %v44, %v96
    %v98 = vmul.f32 %v45, %v96
    %v99 = vmul.f32 %v46, %v96
    %v100 = vmul.f32 %v47, %v96
    %v101 = vadd.f32 %v91, %v97
    %v102 = vadd.f32 %v92, %v98
    %v103 = vadd.f32 %v93, %v99
    %v104 = vadd.f32 %v94, %v100
    %s105 = sld [smem:[#allocation2 + $0x5]]
    %v106 = vstv %s105
    %v107 = vmul.f32 %v49, %v106
    %v108 = vmul.f32 %v50, %v106
    %v109 = vmul.f32 %v51, %v106
    %v110 = vmul.f32 %v52, %v106
    %v111 = vadd.f32 %v101, %v107
    %v112 = vadd.f32 %v102, %v108
    %v113 = vadd.f32 %v103, %v109
    %v114 = vadd.f32 %v104, %v110
    %s115 = sld [smem:[#allocation4 + $0x1]]
    %v116 = vstv %s115
    %v117 = vadd.f32 %v111, %v116
    %v118 = vadd.f32 %v112, %v116
    %v119 = vadd.f32 %v113, %v116
    %v120 = vadd.f32 %v114, %v116
    %s121 = scalar_lea.vmem %s3, 32
    %122 = vst [vmem:[%s121] sm:$0xff] %v117
    %123 = vst [vmem:[%s121 + $0x8] sm:$0xff] %v118
    %124 = vst [vmem:[%s121 + $0x10] sm:$0xff] %v119
    %125 = vst [vmem:[%s121 + $0x18] sm:$0xff] %v120
    %s126 = sld [smem:[#allocation2 + $0x6]]
    %v127 = vstv %s126
    %v128 = vmul.f32 %v39, %v127
    %v129 = vmul.f32 %v40, %v127
    %v130 = vmul.f32 %v41, %v127
    %v131 = vmul.f32 %v42, %v127
    %s132 = sld [smem:[#allocation2 + $0x7]]
    %v133 = vstv %s132
    %v134 = vmul.f32 %v44, %v133
    %v135 = vmul.f32 %v45, %v133
    %v136 = vmul.f32 %v46, %v133
    %v137 = vmul.f32 %v47, %v133
    %v138 = vadd.f32 %v128, %v134
    %v139 = vadd.f32 %v129, %v135
    %v140 = vadd.f32 %v130, %v136
    %v141 = vadd.f32 %v131, %v137
    %s142 = sld [smem:[#allocation2 + $0x8]]
    %v143 = vstv %s142
    %v144 = vmul.f32 %v49, %v143
    %v145 = vmul.f32 %v50, %v143
    %v146 = vmul.f32 %v51, %v143
    %v147 = vmul.f32 %v52, %v143
    %v148 = vadd.f32 %v138, %v144
    %v149 = vadd.f32 %v139, %v145
    %v150 = vadd.f32 %v140, %v146
    %v151 = vadd.f32 %v141, %v147
    %s152 = sld [smem:[#allocation4 + $0x2]]
    %v153 = vstv %s152
    %v154 = vadd.f32 %v148, %v153
    %v155 = vadd.f32 %v149, %v153
    %v156 = vadd.f32 %v150, %v153
    %v157 = vadd.f32 %v151, %v153
    %s158 = scalar_lea.vmem %s3, 64
    %159 = vst [vmem:[%s158] sm:$0xff] %v154
    %160 = vst [vmem:[%s158 + $0x8] sm:$0xff] %v155
    %161 = vst [vmem:[%s158 + $0x10] sm:$0xff] %v156
    %162 = vst [vmem:[%s158 + $0x18] sm:$0xff] %v157
    %s163 = sld [smem:[#allocation2 + $0x9]]
    %v164 = vstv %s163
    %v165 = vmul.f32 %v39, %v164
    %v166 = vmul.f32 %v40, %v164
    %v167 = vmul.f32 %v41, %v164
    %v168 = vmul.f32 %v42, %v164
    %s169 = sld [smem:[#allocation2 + $0xa]]
    %v170 = vstv %s169
    %v171 = vmul.f32 %v44, %v170
    %v172 = vmul.f32 %v45, %v170
    %v173 = vmul.f32 %v46, %v170
    %v174 = vmul.f32 %v47, %v170
    %v175 = vadd.f32 %v165, %v171
    %v176 = vadd.f32 %v166, %v172
    %v177 = vadd.f32 %v167, %v173
    %v178 = vadd.f32 %v168, %v174
    %s179 = sld [smem:[#allocation2 + $0xb]]
    %v180 = vstv %s179
    %v181 = vmul.f32 %v49, %v180
    %v182 = vmul.f32 %v50, %v180
    %v183 = vmul.f32 %v51, %v180
    %v184 = vmul.f32 %v52, %v180
    %v185 = vadd.f32 %v175, %v181
    %v186 = vadd.f32 %v176, %v182
    %v187 = vadd.f32 %v177, %v183
    %v188 = vadd.f32 %v178, %v184
    %s189 = sld [smem:[#allocation4 + $0x3]]
    %v190 = vstv %s189
    %v191 = vadd.f32 %v185, %v190
    %v192 = vadd.f32 %v186, %v190
    %v193 = vadd.f32 %v187, %v190
    %v194 = vadd.f32 %v188, %v190
    %s195 = scalar_lea.vmem %s3, 96
    %196 = vst [vmem:[%s195] sm:$0xff] %v191
    %197 = vst [vmem:[%s195 + $0x8] sm:$0xff] %v192
    %198 = vst [vmem:[%s195 + $0x10] sm:$0xff] %v193
    %199 = vst [vmem:[%s195 + $0x18] sm:$0xff] %v194
    %s200 = sld [smem:[#allocation2 + $0xc]]
    %v201 = vstv %s200
    %v202 = vmul.f32 %v39, %v201
    %v203 = vmul.f32 %v40, %v201
    %v204 = vmul.f32 %v41, %v201
    %v205 = vmul.f32 %v42, %v201
    %s206 = sld [smem:[#allocation2 + $0xd]]
    %v207 = vstv %s206
    %v208 = vmul.f32 %v44, %v207
    %v209 = vmul.f32 %v45, %v207
    %v210 = vmul.f32 %v46, %v207
    %v211 = vmul.f32 %v47, %v207
    %v212 = vadd.f32 %v202, %v208
    %v213 = vadd.f32 %v203, %v209
    %v214 = vadd.f32 %v204, %v210
    %v215 = vadd.f32 %v205, %v211
    %s216 = sld [smem:[#allocation2 + $0xe]]
    %v217 = vstv %s216
    %v218 = vmul.f32 %v49, %v217
    %v219 = vmul.f32 %v50, %v217
    %v220 = vmul.f32 %v51, %v217
    %v221 = vmul.f32 %v52, %v217
    %v222 = vadd.f32 %v212, %v218
    %v223 = vadd.f32 %v213, %v219
    %v224 = vadd.f32 %v214, %v220
    %v225 = vadd.f32 %v215, %v221
    %s226 = sld [smem:[#allocation4 + $0x4]]
    %v227 = vstv %s226
    %v228 = vadd.f32 %v222, %v227
    %v229 = vadd.f32 %v223, %v227
    %v230 = vadd.f32 %v224, %v227
    %v231 = vadd.f32 %v225, %v227
    %s232 = scalar_lea.vmem %s3, 128
    %233 = vst [vmem:[%s232] sm:$0xff] %v228
    %234 = vst [vmem:[%s232 + $0x8] sm:$0xff] %v229
    %235 = vst [vmem:[%s232 + $0x10] sm:$0xff] %v230
    %236 = vst [vmem:[%s232 + $0x18] sm:$0xff] %v231
    // Predicated region
    $region22: #{_conv1x1_interior_pallas.1} parent=1 // pred_check
      _
    $region23: #{_conv1x1_interior_pallas.1} parent=1 // pred_check_branch
      %238 = sbr.rel (0) target = $region25
    $region24: #{_conv1x1_interior_pallas.1} parent=1 // pred_region
      _
    $region25: #{_conv1x1_interior_pallas.1} parent=1 // pred_fallthru
      _
    // Predicated region
    $region26: #{_conv1x1_interior_pallas.1} parent=1 // pred_check
      _
    $region27: #{_conv1x1_interior_pallas.1} parent=1 // pred_check_branch
      %240 = sbr.rel (0) target = $region29
    $region28: #{_conv1x1_interior_pallas.1} parent=1 // pred_region
      _
    $region29: #{_conv1x1_interior_pallas.1} parent=1 // pred_fallthru
      _
    %241 = vsyncpa [#allocation3], 1
    %242 = vsyncpa [#allocation5], 1

</llo_original>
